<compile_context>
chip_gen: v7x
topology: tpu7x:2x2x1
jax: 0.10.0
libtpu: 0.0.40
codegen_flags: <defaults>
</compile_context>

<pallas_src>
import jax
import jax.numpy as jnp
from jax.experimental import pallas as pl
from jax.experimental.pallas import tpu as pltpu

# ----------------------------- "conf" ---------------------------------------
NUM_USERS = 100
NUM_ITEMS = 200
EMBEDDING_DIM = 32          # -> dim = 64, packed K = 128
FM_RANK = 10
AVG_RATING = 3.5


# ----------------------------- Pallas kernel --------------------------------
def fm_kernel(uid_ref, iid_ref, emb_ref, w_ref, bias_ref, out_ref):
    # uid_ref : (B, 1)       int32  VMEM   user indices
    # iid_ref : (B, 1)       int32  VMEM   item indices
    # emb_ref : (NU+NI, 2E)  f32    VMEM   combined embedding table
    # w_ref   : (4E, 2R+1)   f32    VMEM   packed [[V, 0, w], [0, V^2, 0]]
    # bias_ref: (1,)         f32    SMEM   fc_bias + avg_rating
    # out_ref : (B, 1)       f32    VMEM
    B = uid_ref.shape[0]
    NT = emb_ref.shape[0]
    R = FM_RANK

    # --- embedding gather + concat as one one-hot MXU matmul ----------------
    col = jax.lax.broadcasted_iota(jnp.int32, (B, NT), 1)
    onehot = jnp.logical_or(col == uid_ref[...],
                            col == iid_ref[...] + NUM_USERS).astype(jnp.float32)
    x = jnp.dot(onehot, emb_ref[...],
                preferred_element_type=jnp.float32)            # (B, 2E) = [u | i]

    # --- single fused K=128 MXU pass: linear + both interaction terms -------
    a = jnp.concatenate([x, x * x], axis=1)                    # (B, 4E) = [x | x^2]
    y = jnp.dot(a, w_ref[...],
                preferred_element_type=jnp.float32)            # (B, 2R+1)

    # columns [0:R)  -> x @ V        (to be squared)
    # columns [R:2R) -> x^2 @ V^2
    # column  [2R]   -> x @ fc_w     (linear part)
    j = jax.lax.broadcasted_iota(jnp.int32, y.shape, 1)
    contrib = jnp.where(j < R, 0.5 * y * y,
                        jnp.where(j < 2 * R, -0.5 * y, y))
    out_ref[...] = jnp.sum(contrib, axis=1, keepdims=True) + bias_ref[0]


def _fm_pallas(uid, iid, emb_comb, w_packed, bias):
    B = uid.shape[0]
    # TODO(synk): if B ever grows beyond a few thousand rows, add a 1-D grid
    # over the batch (block (TM, 1) for uid/iid/out, TM a multiple of 8, sized
    # for the 32 MiB scoped-VMEM default on v7x) with
    # dimension_semantics=("parallel",) so the input tile double-buffers and
    # shards across TensorCores; at B=8 a single block is optimal.
    return pl.pallas_call(
        fm_kernel,
        out_shape=jax.ShapeDtypeStruct((B, 1), jnp.float32),
        in_specs=[
            pl.BlockSpec(memory_space=pltpu.MemorySpace.VMEM),   # uid
            pl.BlockSpec(memory_space=pltpu.MemorySpace.VMEM),   # iid
            pl.BlockSpec(memory_space=pltpu.MemorySpace.VMEM),   # emb_comb
            pl.BlockSpec(memory_space=pltpu.MemorySpace.VMEM),   # W_packed
            pl.BlockSpec(memory_space=pltpu.MemorySpace.SMEM),   # bias scalar
        ],
        out_specs=pl.BlockSpec(memory_space=pltpu.MemorySpace.VMEM),
    )(uid, iid, emb_comb, w_packed, bias)


# ----------------------------- parameters -----------------------------------
def init_params(key):
    dim = EMBEDDING_DIM * 2
    ks = jax.random.split(key, 6)

    # xavier_uniform_ for embedding tables: bound = sqrt(6 / (fan_in + fan_out))
    bu = (6.0 / (NUM_USERS + EMBEDDING_DIM)) ** 0.5
    bi = (6.0 / (NUM_ITEMS + EMBEDDING_DIM)) ** 0.5
    user_emb = jax.random.uniform(ks[0], (NUM_USERS, EMBEDDING_DIM),
                                  jnp.float32, -bu, bu)
    item_emb = jax.random.uniform(ks[1], (NUM_ITEMS, EMBEDDING_DIM),
                                  jnp.float32, -bi, bi)

    fc_w = jax.random.uniform(ks[2], (1, dim), jnp.float32, -0.05, 0.05)
    fc_b = jnp.float32(0.0)
    fm_V = jax.random.uniform(ks[3], (dim, FM_RANK), jnp.float32, -0.05, 0.05)
    b_users = jax.random.uniform(ks[4], (NUM_USERS, 1), jnp.float32, 0.0, 0.1)
    b_items = jax.random.uniform(ks[5], (NUM_ITEMS, 1), jnp.float32, 0.0, 0.1)
    return dict(user_emb=user_emb, item_emb=item_emb, fc_w=fc_w, fc_b=fc_b,
                fm_V=fm_V, b_users=b_users, b_items=b_items)


def prepare_decoder_fm(params):
    """One-time, call-invariant packing of parameters for the fused kernel."""
    dim = 2 * EMBEDDING_DIM
    V = params["fm_V"].astype(jnp.float32)                    # (dim, R)
    w_col = params["fc_w"].astype(jnp.float32).T              # (dim, 1)
    zR = jnp.zeros((dim, FM_RANK), jnp.float32)
    z1 = jnp.zeros((dim, 1), jnp.float32)
    w_top = jnp.concatenate([V, zR, w_col], axis=1)           # rows for x
    w_bot = jnp.concatenate([zR, V * V, z1], axis=1)          # rows for x^2
    w_packed = jnp.concatenate([w_top, w_bot], axis=0)        # (2*dim, 2R+1)

    zu = jnp.zeros((NUM_USERS, EMBEDDING_DIM), jnp.float32)
    zi = jnp.zeros((NUM_ITEMS, EMBEDDING_DIM), jnp.float32)
    emb_comb = jnp.concatenate([
        jnp.concatenate([params["user_emb"], zu], axis=1),
        jnp.concatenate([zi, params["item_emb"]], axis=1),
    ], axis=0)                                                # (NU+NI, dim)

    bias = jnp.asarray([params["fc_b"] + AVG_RATING], dtype=jnp.float32)  # (1,)
    return dict(W_packed=w_packed, emb_comb=emb_comb, bias=bias)


# ----------------------------- forward passes -------------------------------
@jax.jit
def decoder_fm_forward(prepared, user, item):
    B = user.shape[0]
    uid = user.astype(jnp.int32).reshape(B, 1)
    iid = item.astype(jnp.int32).reshape(B, 1)
    # 0 * b_users[user] + 0 * b_items[item] from the reference is exactly zero
    # for finite parameters, so the gathers are dropped entirely.
    out = _fm_pallas(uid, iid, prepared["emb_comb"], prepared["W_packed"],
                     prepared["bias"])
    return jnp.squeeze(out, axis=1)                           # (B,)


def decoder_fm_reference(params, user, item):
    u_out = jnp.take(params["user_emb"], user, axis=0)
    i_out = jnp.take(params["item_emb"], item, axis=0)
    x = jnp.concatenate([u_out, i_out], axis=1)
    lin = x @ params["fc_w"].T + params["fc_b"]
    t1 = (x @ params["fm_V"]) ** 2
    t2 = (x ** 2) @ (params["fm_V"] ** 2)
    out = (0.5 * jnp.sum(t1 - t2, axis=1, keepdims=True) + lin
           + 0.0 * params["b_users"][user] + 0.0 * params["b_items"][item]
           + AVG_RATING)
    return jnp.squeeze(out, axis=1)


# ----------------------------- main ------------------------------------------
if __name__ == "__main__":
    key = jax.random.PRNGKey(0)
    params = init_params(key)
    prepared = prepare_decoder_fm(params)

    B = 8
    ku, ki = jax.random.split(jax.random.PRNGKey(1))
    user = jax.random.randint(ku, (B,), 0, NUM_USERS, dtype=jnp.int32)
    item = jax.random.randint(ki, (B,), 0, NUM_ITEMS, dtype=jnp.int32)

    pred = jax.block_until_ready(decoder_fm_forward(prepared, user, item))
    ref = decoder_fm_reference(params, user, item)

    assert pred.shape == (B,)
    assert jnp.allclose(pred, ref, atol=1e-4, rtol=1e-4), (pred, ref)

    print("KERNEL_OK")
</pallas_src>

<mosaic_0001>
module attributes {stable_mosaic.version = 11 : i64} {
  func.func @fm_kernel(%arg0: memref<8x1xi32, #tpu.memory_space<vmem>>, %arg1: memref<8x1xi32, #tpu.memory_space<vmem>>, %arg2: memref<300x64xf32, #tpu.memory_space<vmem>>, %arg3: memref<128x21xf32, #tpu.memory_space<vmem>>, %arg4: memref<1xf32, #tpu.memory_space<smem>>, %arg5: memref<8x1xf32, #tpu.memory_space<vmem>>) attributes {dimension_semantics = [], scalar_prefetch = 0 : i64, scratch_operands = 0 : i64, tpu.core_type = #tpu.core_type<tc>} {
    %0 = tpu.iota {dimensions = array<i32: 1>} : vector<8x300xi32>
    %c0 = arith.constant 0 : index
    %c0_0 = arith.constant 0 : index
    %1 = vector.load %arg0[%c0, %c0_0] : memref<8x1xi32, #tpu.memory_space<vmem>>, vector<8x1xi32>
    %2 = vector.broadcast %1 : vector<8x1xi32> to vector<8x300xi32>
    %3 = arith.cmpi eq, %0, %2 : vector<8x300xi32>
    %c0_1 = arith.constant 0 : index
    %c0_2 = arith.constant 0 : index
    %4 = vector.load %arg1[%c0_1, %c0_2] : memref<8x1xi32, #tpu.memory_space<vmem>>, vector<8x1xi32>
    %c100_i32 = arith.constant 100 : i32
    %5 = vector.broadcast %c100_i32 : i32 to vector<8x1xi32>
    %6 = arith.addi %4, %5 : vector<8x1xi32>
    %7 = vector.broadcast %6 : vector<8x1xi32> to vector<8x300xi32>
    %8 = arith.cmpi eq, %0, %7 : vector<8x300xi32>
    %9 = arith.ori %3, %8 : vector<8x300xi1>
    %10 = arith.extui %9 : vector<8x300xi1> to vector<8x300xi32>
    %11 = arith.sitofp %10 : vector<8x300xi32> to vector<8x300xf32>
    %c0_3 = arith.constant 0 : index
    %c0_4 = arith.constant 0 : index
    %12 = vector.load %arg2[%c0_3, %c0_4] : memref<300x64xf32, #tpu.memory_space<vmem>>, vector<300x64xf32>
    %cst = arith.constant dense<0.000000e+00> : vector<8x64xf32>
    %13 = tpu.matmul %11, %12, %cst {dimension_numbers = #tpu.dot_dimension_numbers<[1], [0], [0], [1], [0, 0, 1, 1], [], []>} : vector<8x300xf32>, vector<300x64xf32>, vector<8x64xf32> -> vector<8x64xf32>
    %14 = arith.mulf %13, %13 : vector<8x64xf32>
    %15 = tpu.concatenate %13, %14 in 1 : vector<8x64xf32>, vector<8x64xf32> -> vector<8x128xf32>
    %c0_5 = arith.constant 0 : index
    %c0_6 = arith.constant 0 : index
    %16 = vector.load %arg3[%c0_5, %c0_6] : memref<128x21xf32, #tpu.memory_space<vmem>>, vector<128x21xf32>
    %cst_7 = arith.constant dense<0.000000e+00> : vector<8x21xf32>
    %17 = tpu.matmul %15, %16, %cst_7 {dimension_numbers = #tpu.dot_dimension_numbers<[1], [0], [0], [1], [0, 0, 1, 1], [], []>} : vector<8x128xf32>, vector<128x21xf32>, vector<8x21xf32> -> vector<8x21xf32>
    %18 = tpu.iota {dimensions = array<i32: 1>} : vector<8x21xi32>
    %c10_i32 = arith.constant 10 : i32
    %19 = vector.broadcast %c10_i32 : i32 to vector<8x21xi32>
    %20 = arith.cmpi slt, %18, %19 : vector<8x21xi32>
    %cst_8 = arith.constant 5.000000e-01 : f32
    %21 = vector.broadcast %cst_8 : f32 to vector<8x21xf32>
    %22 = arith.mulf %21, %17 : vector<8x21xf32>
    %23 = arith.mulf %22, %17 : vector<8x21xf32>
    %c20_i32 = arith.constant 20 : i32
    %24 = vector.broadcast %c20_i32 : i32 to vector<8x21xi32>
    %25 = arith.cmpi slt, %18, %24 : vector<8x21xi32>
    %cst_9 = arith.constant -5.000000e-01 : f32
    %26 = vector.broadcast %cst_9 : f32 to vector<8x21xf32>
    %27 = arith.mulf %26, %17 : vector<8x21xf32>
    %28 = arith.select %25, %27, %17 : vector<8x21xi1>, vector<8x21xf32>
    %29 = arith.select %20, %23, %28 : vector<8x21xi1>, vector<8x21xf32>
    %cst_10 = arith.constant dense<0.000000e+00> : vector<8xf32>
    %30 = vector.multi_reduction <add>, %29, %cst_10 [1] : vector<8x21xf32> to vector<8xf32>
    %31 = vector.shape_cast %30 : vector<8xf32> to vector<8x1xf32>
    %c0_11 = arith.constant 0 : index
    %32 = memref.load %arg4[%c0_11] : memref<1xf32, #tpu.memory_space<smem>>
    %33 = vector.broadcast %32 : f32 to vector<8x1xf32>
    %34 = arith.addf %31, %33 : vector<8x1xf32>
    %c0_12 = arith.constant 0 : index
    %c0_13 = arith.constant 0 : index
    %35 = vector.load %arg5[%c0_12, %c0_13] : memref<8x1xf32, #tpu.memory_space<vmem>>, vector<8x1xf32>
    tpu.vector_store %arg5[%c0_12, %c0_13], %34 {strides = array<i32>} : memref<8x1xf32, #tpu.memory_space<vmem>>, vector<8x1xf32>,
    return
  }
}

</mosaic_0001>

<llo_original>
// kernel: decoder_fm_forward.1
$region0: #{decoder_fm_forward.1}
  #allocation0 [shape = 'u32[]', space=smem, size = 0x4, offset = 0x4, fixed_abs, tag = 'smem constant byte address 0x4 - core index']
  #allocation1 [shape = 'u32[144,128]{1,0:T(1,128)}', space=vmem, size = 0x12000, scoped, tag = 'internal scratch']
  #allocation2 [shape = 'f32[1]{0:T(128)S(6)}', space=smem, size = 0x200, scoped, tag = 'scoped memory for decoder_fm_forward.1']
  %s0 = inlined_call_operand.vmem [shape: s32[8,1], index: 0, kind: input, shape index: {}]
  %s1 = inlined_call_operand.vmem [shape: s32[8,1], index: 1, kind: input, shape index: {}]
  %s2 = inlined_call_operand.vmem [shape: f32[300,64], index: 2, kind: input, shape index: {}]
  %s3 = inlined_call_operand.vmem [shape: f32[128,21], index: 3, kind: input, shape index: {}]
  %s4 = inlined_call_operand.<no memory space> [shape: f32[1], index: 4, kind: input, shape index: {}]
  %s5 = inlined_call_operand.vmem [shape: f32[8,1], index: 5, kind: output, shape index: {}]
  %s6 = sld [smem:[#allocation0]]
  $region30: #{decoder_fm_forward.1} parent=0
    _
  %s8 = ssub.s32 1, %s6
  %s9 = scalar_select 0, %s8, %s6
  %10 = sst [smem:[#allocation2]] %s4
  // Predicated region
  $region2: #{decoder_fm_forward.1} parent=0 // pred_check
    _
  $region3: #{decoder_fm_forward.1} parent=0 // pred_check_branch
    %12 = sbr.rel (0) target = $region5
  $region4: #{decoder_fm_forward.1} parent=0 // pred_region
    _
  $region5: #{decoder_fm_forward.1} parent=0 // pred_fallthru
    _
  // Predicated region
  $region6: #{decoder_fm_forward.1} parent=0 // pred_check
    _
  $region7: #{decoder_fm_forward.1} parent=0 // pred_check_branch
    %14 = sbr.rel (0) target = $region9
  $region8: #{decoder_fm_forward.1} parent=0 // pred_region
    _
  $region9: #{decoder_fm_forward.1} parent=0 // pred_fallthru
    _
  // Predicated region
  $region10: #{decoder_fm_forward.1} parent=0 // pred_check
    _
  $region11: #{decoder_fm_forward.1} parent=0 // pred_check_branch
    %16 = sbr.rel (0) target = $region13
  $region12: #{decoder_fm_forward.1} parent=0 // pred_region
    _
  $region13: #{decoder_fm_forward.1} parent=0 // pred_fallthru
    _
  // Predicated region
  $region14: #{decoder_fm_forward.1} parent=0 // pred_check
    _
  $region15: #{decoder_fm_forward.1} parent=0 // pred_check_branch
    %18 = sbr.rel (0) target = $region17
  $region16: #{decoder_fm_forward.1} parent=0 // pred_region
    _
  $region17: #{decoder_fm_forward.1} parent=0 // pred_fallthru
    _
  // Predicated region
  $region18: #{decoder_fm_forward.1} parent=0 // pred_check
    _
  $region19: #{decoder_fm_forward.1} parent=0 // pred_check_branch
    %20 = sbr.rel (0) target = $region21
  $region20: #{decoder_fm_forward.1} parent=0 // pred_region
    _
  $region21: #{decoder_fm_forward.1} parent=0 // pred_fallthru
    _
  %v21 = vlaneseq
  %v22 = vand.u32 %v21, 127
  %v23 = vadd.s32 %v22, 128
  %v24 = vadd.s32 %v22, 256
  %v25 = vld [vmem:[%s0] sm:$0xff]
  %26 = vset.pattern.permute.xlu0 0
  %27 = vperm.xlu0 %26, %v25
  %v28 = vpop.permute.xlu0 %27
  %vm29 = vcmp.eq.s32.totalorder %v22, %v28
  %vm30 = vcmp.eq.s32.totalorder %v23, %v28
  %vm31 = vcmp.eq.s32.totalorder %v24, %v28
  %v32 = vld [vmem:[%s1] sm:$0xff]
  %v33 = vadd.s32 %v32, 100
  %34 = vset.pattern.permute.xlu0 0
  %35 = vperm.xlu0 %34, %v33
  %v36 = vpop.permute.xlu0 %35
  %vm37 = vcmp.eq.s32.totalorder %v22, %v36
  %vm38 = vcmp.eq.s32.totalorder %v23, %v36
  %vm39 = vcmp.eq.s32.totalorder %v24, %v36
  %vm40 = vmor %vm29, %vm37
  %vm41 = vmor %vm30, %vm38
  %vm42 = vmor %vm31, %vm39
  %v43 = vsel %vm40, 1, 0
  %v44 = vsel %vm41, 1, 0
  %v45 = vsel %vm42, 1, 0
  %v46 = vcvt.s32.f32 %v43
  %v47 = vcvt.s32.f32 %v44
  %v48 = vcvt.s32.f32 %v45
  %v49 = vld [vmem:[%s2] sm:$0xff]
  %v50 = vld [vmem:[%s2 + $0x8] sm:$0xff]
  %v51 = vld [vmem:[%s2 + $0x10] sm:$0xff]
  %v52 = vld [vmem:[%s2 + $0x18] sm:$0xff]
  %v53 = vld [vmem:[%s2 + $0x20] sm:$0xff]
  %v54 = vld [vmem:[%s2 + $0x28] sm:$0xff]
  %v55 = vld [vmem:[%s2 + $0x30] sm:$0xff]
  %v56 = vld [vmem:[%s2 + $0x38] sm:$0xff]
  %v57 = vld [vmem:[%s2 + $0x40] sm:$0xff]
  %v58 = vld [vmem:[%s2 + $0x48] sm:$0xff]
  %v59 = vld [vmem:[%s2 + $0x50] sm:$0xff]
  %v60 = vld [vmem:[%s2 + $0x58] sm:$0xff]
  %v61 = vld [vmem:[%s2 + $0x60] sm:$0xff]
  %v62 = vld [vmem:[%s2 + $0x68] sm:$0xff]
  %v63 = vld [vmem:[%s2 + $0x70] sm:$0xff]
  %v64 = vld [vmem:[%s2 + $0x78] sm:$0xff]
  %v65 = vld [vmem:[%s2 + $0x80] sm:$0xff]
  %v66 = vld [vmem:[%s2 + $0x88] sm:$0xff]
  %v67 = vld [vmem:[%s2 + $0x90] sm:$0xff]
  %v68 = vld [vmem:[%s2 + $0x98] sm:$0xff]
  %v69 = vld [vmem:[%s2 + $0xa0] sm:$0xff]
  %v70 = vld [vmem:[%s2 + $0xa8] sm:$0xff]
  %v71 = vld [vmem:[%s2 + $0xb0] sm:$0xff]
  %v72 = vld [vmem:[%s2 + $0xb8] sm:$0xff]
  %v73 = vld [vmem:[%s2 + $0xc0] sm:$0xff]
  %v74 = vld [vmem:[%s2 + $0xc8] sm:$0xff]
  %v75 = vld [vmem:[%s2 + $0xd0] sm:$0xff]
  %v76 = vld [vmem:[%s2 + $0xd8] sm:$0xff]
  %v77 = vld [vmem:[%s2 + $0xe0] sm:$0xff]
  %v78 = vld [vmem:[%s2 + $0xe8] sm:$0xff]
  %v79 = vld [vmem:[%s2 + $0xf0] sm:$0xff]
  %v80 = vld [vmem:[%s2 + $0xf8] sm:$0xff]
  %v81 = vld [vmem:[%s2 + $0x100] sm:$0xff]
  %v82 = vld [vmem:[%s2 + $0x108] sm:$0xff]
  %v83 = vld [vmem:[%s2 + $0x110] sm:$0xff]
  %v84 = vld [vmem:[%s2 + $0x118] sm:$0xff]
  %v85 = vld [vmem:[%s2 + $0x120] sm:$0xff]
  %v86 = vld [vmem:[%s2 + $0x128] sm:$0xf]
  %vm87 = vcmask 359424
  %v89 = vsel %vm87, %v48, 0
  %vm91 = vcmask 1043456
  %v93 = vsel %vm91, %v86, 0
  %95 = vmatprep.subr.mxu0 0.0
  %96 = vmatpush1.msra.mxu0 %v49
  %97 = vmatprep.subr.mxu0 0.0
  %98 = vmatpush1.msra.mxu0 %v50
  %99 = vmatprep.subr.mxu0 0.0
  %100 = vmatpush1.msra.mxu0 %v51
  %101 = vmatprep.subr.mxu0 0.0
  %102 = vmatpush1.msra.mxu0 %v52
  %103 = vmatprep.subr.mxu0 0.0
  %104 = vmatpush1.msra.mxu0 %v53
  %105 = vmatprep.subr.mxu0 0.0
  %106 = vmatpush1.msra.mxu0 %v54
  %107 = vmatprep.subr.mxu0 0.0
  %108 = vmatpush1.msra.mxu0 %v55
  %109 = vmatprep.subr.mxu0 0.0
  %110 = vmatpush1.msra.mxu0 %v56
  %111 = vmatprep.subr.mxu0 0.0
  %112 = vmatpush1.msra.mxu0 %v57
  %113 = vmatprep.subr.mxu0 0.0
  %114 = vmatpush1.msra.mxu0 %v58
  %115 = vmatprep.subr.mxu0 0.0
  %116 = vmatpush1.msra.mxu0 %v59
  %117 = vmatprep.subr.mxu0 0.0
  %118 = vmatpush1.msra.mxu0 %v60
  %119 = vmatprep.subr.mxu0 0.0
  %120 = vmatpush1.msra.mxu0 %v61
  %121 = vmatprep.subr.mxu0 0.0
  %122 = vmatpush1.msra.mxu0 %v62
  %123 = vmatprep.subr.mxu0 0.0
  %124 = vmatpush1.msra.mxu0 %v63
  %125 = vmatprep.subr.mxu0 0.0
  %126 = vmatpush1.msra.mxu0 %v64
  %127 = vmatprep.subr.mxu0 0.0
  %128 = vmatpush1.msra.mxu0 %v65
  %129 = vmatprep.subr.mxu0 0.0
  %130 = vmatpush1.msra.mxu0 %v66
  %131 = vmatprep.subr.mxu0 0.0
  %132 = vmatpush1.msra.mxu0 %v67
  %133 = vmatprep.subr.mxu0 0.0
  %134 = vmatpush1.msra.mxu0 %v68
  %135 = vmatprep.subr.mxu0 0.0
  %136 = vmatpush1.msra.mxu0 %v69
  %137 = vmatprep.subr.mxu0 0.0
  %138 = vmatpush1.msra.mxu0 %v70
  %139 = vmatprep.subr.mxu0 0.0
  %140 = vmatpush1.msra.mxu0 %v71
  %141 = vmatprep.subr.mxu0 0.0
  %142 = vmatpush1.msra.mxu0 %v72
  %143 = vmatprep.subr.mxu0 0.0
  %144 = vmatpush1.msra.mxu0 %v73
  %145 = vmatprep.subr.mxu0 0.0
  %146 = vmatpush1.msra.mxu0 %v74
  %147 = vmatprep.subr.mxu0 0.0
  %148 = vmatpush1.msra.mxu0 %v75
  %149 = vmatprep.subr.mxu0 0.0
  %150 = vmatpush1.msra.mxu0 %v76
  %151 = vmatprep.subr.mxu0 0.0
  %152 = vmatpush1.msra.mxu0 %v77
  %153 = vmatprep.subr.mxu0 0.0
  %154 = vmatpush1.msra.mxu0 %v78
  %155 = vmatprep.subr.mxu0 0.0
  %156 = vmatpush1.msra.mxu0 %v79
  %157 = vmatprep.subr.mxu0 0.0
  %158 = vmatpush1.msra.mxu0 %v80
  %159 = vmatprep.mubr.f32.mxu0 %v47
  %160 = vmatmul.mubr.f32.gmra.mrb[0].mxu0 %v46
  %v161 = vpop.f32.mrb[0].mxu0
  %v162 = vadd.f32 0.0, %v161
  %v163 = vpop.f32.mrb[0].mxu0
  %164 = vdwg.mxu0
  %165 = vmatprep.subr.mxu0 0.0
  %166 = vmatpush1.msra.mxu0 %v81
  %167 = vmatprep.subr.mxu0 0.0
  %168 = vmatpush1.msra.mxu0 %v82
  %169 = vmatprep.subr.mxu0 0.0
  %170 = vmatpush1.msra.mxu0 %v83
  %171 = vmatprep.subr.mxu0 0.0
  %172 = vmatpush1.msra.mxu0 %v84
  %173 = vmatprep.subr.mxu0 0.0
  %174 = vmatpush1.msra.mxu0 %v85
  %175 = vmatprep.subr.mxu0 0.0
  %176 = vmatpush1.msra.mxu0 %v93
  %177 = vmatprep.subr.mxu0 0.0
  %178 = vmatpush1.msra.mxu0 0.0
  %179 = vmatprep.subr.mxu0 0.0
  %180 = vmatpush1.msra.mxu0 0.0
  %181 = vmatprep.subr.mxu0 0.0
  %182 = vmatpush1.msra.mxu0 0.0
  %183 = vmatprep.subr.mxu0 0.0
  %184 = vmatpush1.msra.mxu0 0.0
  %185 = vmatprep.subr.mxu0 0.0
  %186 = vmatpush1.msra.mxu0 0.0
  %187 = vmatprep.subr.mxu0 0.0
  %188 = vmatpush1.msra.mxu0 0.0
  %189 = vmatprep.subr.mxu0 0.0
  %190 = vmatpush1.msra.mxu0 0.0
  %191 = vmatprep.subr.mxu0 0.0
  %192 = vmatpush1.msra.mxu0 0.0
  %193 = vmatprep.subr.mxu0 0.0
  %194 = vmatpush1.msra.mxu0 0.0
  %195 = vmatprep.subr.mxu0 0.0
  %196 = vmatpush1.msra.mxu0 0.0
  %197 = vmatprep.subr.mxu0 0.0
  %198 = vmatpush1.msra.mxu0 0.0
  %199 = vmatprep.subr.mxu0 0.0
  %200 = vmatpush1.msra.mxu0 0.0
  %201 = vmatprep.subr.mxu0 0.0
  %202 = vmatpush1.msra.mxu0 0.0
  %203 = vmatprep.subr.mxu0 0.0
  %204 = vmatpush1.msra.mxu0 0.0
  %205 = vmatprep.subr.mxu0 0.0
  %206 = vmatpush1.msra.mxu0 0.0
  %207 = vmatprep.subr.mxu0 0.0
  %208 = vmatpush1.msra.mxu0 0.0
  %209 = vmatprep.subr.mxu0 0.0
  %210 = vmatpush1.msra.mxu0 0.0
  %211 = vmatprep.subr.mxu0 0.0
  %212 = vmatpush1.msra.mxu0 0.0
  %213 = vmatprep.subr.mxu0 0.0
  %214 = vmatpush1.msra.mxu0 0.0
  %215 = vmatprep.subr.mxu0 0.0
  %216 = vmatpush1.msra.mxu0 0.0
  %217 = vmatprep.subr.mxu0 0.0
  %218 = vmatpush1.msra.mxu0 0.0
  %219 = vmatprep.subr.mxu0 0.0
  %220 = vmatpush1.msra.mxu0 0.0
  %221 = vmatprep.subr.mxu0 0.0
  %222 = vmatpush1.msra.mxu0 0.0
  %223 = vmatprep.subr.mxu0 0.0
  %224 = vmatpush1.msra.mxu0 0.0
  %225 = vmatprep.subr.mxu0 0.0
  %226 = vmatpush1.msra.mxu0 0.0
  %227 = vmatprep.subr.mxu0 0.0
  %228 = vmatpush1.msra.mxu0 0.0
  %229 = vmatprep.mubr.f32.mxu0 0.0
  %230 = vmatmul.mubr.f32.gmra.mrb[0].mxu0 %v89
  %v231 = vpop.f32.mrb[0].mxu0
  %v232 = vadd.f32 %v162, %v231
  %v233 = vpop.f32.mrb[0].mxu0
  %234 = vdwg.mxu0
  %v235 = vmul.f32 %v232, %v232
  %237 = vrot.lane.b32.xlu0 %v235, 64
  %v238 = vpop.permute.xlu0 %237
  %vm240 = vcmask 523264
  %v241 = vsel %vm240, %v232, %v238
  %v242 = vld [vmem:[%s3] sm:$0xff]
  %v243 = vld [vmem:[%s3 + $0x8] sm:$0xff]
  %v244 = vld [vmem:[%s3 + $0x10] sm:$0xff]
  %v245 = vld [vmem:[%s3 + $0x18] sm:$0xff]
  %v246 = vld [vmem:[%s3 + $0x20] sm:$0xff]
  %v247 = vld [vmem:[%s3 + $0x28] sm:$0xff]
  %v248 = vld [vmem:[%s3 + $0x30] sm:$0xff]
  %v249 = vld [vmem:[%s3 + $0x38] sm:$0xff]
  %v250 = vld [vmem:[%s3 + $0x40] sm:$0xff]
  %v251 = vld [vmem:[%s3 + $0x48] sm:$0xff]
  %v252 = vld [vmem:[%s3 + $0x50] sm:$0xff]
  %v253 = vld [vmem:[%s3 + $0x58] sm:$0xff]
  %v254 = vld [vmem:[%s3 + $0x60] sm:$0xff]
  %v255 = vld [vmem:[%s3 + $0x68] sm:$0xff]
  %v256 = vld [vmem:[%s3 + $0x70] sm:$0xff]
  %v257 = vld [vmem:[%s3 + $0x78] sm:$0xff]
  %258 = vmatprep.subr.mxu0 0.0
  %259 = vmatpush1.msra.mxu0 %v242
  %260 = vmatprep.subr.mxu0 0.0
  %261 = vmatpush1.msra.mxu0 %v243
  %262 = vmatprep.subr.mxu0 0.0
  %263 = vmatpush1.msra.mxu0 %v244
  %264 = vmatprep.subr.mxu0 0.0
  %265 = vmatpush1.msra.mxu0 %v245
  %266 = vmatprep.subr.mxu0 0.0
  %267 = vmatpush1.msra.mxu0 %v246
  %268 = vmatprep.subr.mxu0 0.0
  %269 = vmatpush1.msra.mxu0 %v247
  %270 = vmatprep.subr.mxu0 0.0
  %271 = vmatpush1.msra.mxu0 %v248
  %272 = vmatprep.subr.mxu0 0.0
  %273 = vmatpush1.msra.mxu0 %v249
  %274 = vmatprep.subr.mxu0 0.0
  %275 = vmatpush1.msra.mxu0 %v250
  %276 = vmatprep.subr.mxu0 0.0
  %277 = vmatpush1.msra.mxu0 %v251
  %278 = vmatprep.subr.mxu0 0.0
  %279 = vmatpush1.msra.mxu0 %v252
  %280 = vmatprep.subr.mxu0 0.0
  %281 = vmatpush1.msra.mxu0 %v253
  %282 = vmatprep.subr.mxu0 0.0
  %283 = vmatpush1.msra.mxu0 %v254
  %284 = vmatprep.subr.mxu0 0.0
  %285 = vmatpush1.msra.mxu0 %v255
  %286 = vmatprep.subr.mxu0 0.0
  %287 = vmatpush1.msra.mxu0 %v256
  %288 = vmatprep.subr.mxu0 0.0
  %289 = vmatpush1.msra.mxu0 %v257
  %290 = vmatprep.subr.mxu0 0.0
  %291 = vmatpush1.msra.mxu0 0.0
  %292 = vmatprep.subr.mxu0 0.0
  %293 = vmatpush1.msra.mxu0 0.0
  %294 = vmatprep.subr.mxu0 0.0
  %295 = vmatpush1.msra.mxu0 0.0
  %296 = vmatprep.subr.mxu0 0.0
  %297 = vmatpush1.msra.mxu0 0.0
  %298 = vmatprep.subr.mxu0 0.0
  %299 = vmatpush1.msra.mxu0 0.0
  %300 = vmatprep.subr.mxu0 0.0
  %301 = vmatpush1.msra.mxu0 0.0
  %302 = vmatprep.subr.mxu0 0.0
  %303 = vmatpush1.msra.mxu0 0.0
  %304 = vmatprep.subr.mxu0 0.0
  %305 = vmatpush1.msra.mxu0 0.0
  %306 = vmatprep.subr.mxu0 0.0
  %307 = vmatpush1.msra.mxu0 0.0
  %308 = vmatprep.subr.mxu0 0.0
  %309 = vmatpush1.msra.mxu0 0.0
  %310 = vmatprep.subr.mxu0 0.0
  %311 = vmatpush1.msra.mxu0 0.0
  %312 = vmatprep.subr.mxu0 0.0
  %313 = vmatpush1.msra.mxu0 0.0
  %314 = vmatprep.subr.mxu0 0.0
  %315 = vmatpush1.msra.mxu0 0.0
  %316 = vmatprep.subr.mxu0 0.0
  %317 = vmatpush1.msra.mxu0 0.0
  %318 = vmatprep.subr.mxu0 0.0
  %319 = vmatpush1.msra.mxu0 0.0
  %320 = vmatprep.subr.mxu0 0.0
  %321 = vmatpush1.msra.mxu0 0.0
  %322 = vmatprep.mubr.f32.mxu0 0.0
  %323 = vmatmul.mubr.f32.gmra.mrb[0].mxu0 %v241
  %v324 = vpop.f32.mrb[0].mxu0
  %v325 = vadd.f32 0.0, %v324
  %v326 = vpop.f32.mrb[0].mxu0
  %327 = vdwg.mxu0
  %vm328 = vcmp.lt.s32.totalorder %v22, 10
  %v329 = vmul.f32 %v325, 0.5
  %v330 = vmul.f32 %v329, %v325
  %vm331 = vcmp.lt.s32.totalorder %v22, 20
  %v332 = vmul.f32 %v325, -0.5
  %v333 = vsel %vm331, %v332, %v325
  %v334 = vsel %vm328, %v330, %v333
  %vm335 = vcmask 171008
  %v336 = vsel %vm335, %v334, 0.0
  %337 = vadd.xlane.f32.xlu0 %v336
  %v338 = vpop.xlane.xlu0 %337
  %s339 = sld [smem:[#allocation2]]
  %v340 = vstv %s339
  %v341 = vadd.f32 %v338, %v340
  %vm342 = vcmask 7168
  %343 = vst.msk [vmem:[%s5] sm:$0xff] %vm342, %v341
  // Predicated region
  $region22: #{decoder_fm_forward.1} parent=0 // pred_check
    _
  $region23: #{decoder_fm_forward.1} parent=0 // pred_check_branch
    %345 = sbr.rel (0) target = $region25
  $region24: #{decoder_fm_forward.1} parent=0 // pred_region
    _
  $region25: #{decoder_fm_forward.1} parent=0 // pred_fallthru
    _
  // Predicated region
  $region26: #{decoder_fm_forward.1} parent=0 // pred_check
    _
  $region27: #{decoder_fm_forward.1} parent=0 // pred_check_branch
    %347 = sbr.rel (0) target = $region29
  $region28: #{decoder_fm_forward.1} parent=0 // pred_region
    _
  $region29: #{decoder_fm_forward.1} parent=0 // pred_fallthru
    _

</llo_original>
